<compile_context>
chip_gen: v5e
topology: v5e:2x2
jax: 0.10.0
libtpu: 0.0.40
codegen_flags: <defaults>
</compile_context>

<pallas_src>
import functools

import jax
import jax.numpy as jnp
from jax.experimental import pallas as pl
from jax.experimental.pallas import tpu as pltpu

IN_FEATURES = 20
OUT_FEATURES = 10
PACK = 32                           # original rows packed per lane-dense row
IN_PACKED = PACK * IN_FEATURES      # 640 = 5 * 128 lanes (dense input DMA)
OUT_PACKED = PACK * OUT_FEATURES    # 320 lanes (full last dim of the output)


def _round_up(n, m):
    return ((n + m - 1) // m) * m


def _vmem_budget_bytes():
    """Per-generation VMEM budget this kernel is allowed to request."""
    try:
        cap = int(pltpu.get_tpu_info().vmem_capacity_bytes)
    except Exception:
        cap = 64 * 1024 * 1024      # conservative (v7x-sized) fallback
    # Use at most half of physical VMEM, never more than 64 MiB:
    #   v7x (64 MiB)  -> 32 MiB;   v5e / v6e (128 MiB) -> 64 MiB.
    return min(cap // 2, 64 * 1024 * 1024)


def _linear_packed_kernel(x_ref, w_ref, b_ref, o_ref):
    # (block_tiles, 640) @ (640, 320) on the MXU, f32 accumulation;
    # bias broadcast-add on the VPU.
    y = jnp.dot(x_ref[...], w_ref[...], preferred_element_type=jnp.float32)
    o_ref[...] = (y + b_ref[...]).astype(o_ref.dtype)


@functools.partial(jax.jit, static_argnames=("block_rows",))
def fc_m13_forward(x, w_big, b_big, block_rows=None):
    """x: (B, 20) f32, w_big: (640, 320), b_big: (1, 320) -> (B, 10) f32."""
    B = x.shape[0]

    # Pad only up to a multiple of PACK (0..31 rows) when B is ragged;
    # B % 32 == 0 callers get fully zero-copy reshapes in and out.
    pad = (-B) % PACK
    if pad:
        x = jnp.pad(x, ((0, pad), (0, 0)))
    bp = B + pad
    tiles = bp // PACK
    x_p = x.reshape(tiles, IN_PACKED)          # contiguous -> zero-copy view

    # ---- batch-tile selection (generation-aware) --------------------------
    vmem_budget = _vmem_budget_bytes()
    row_bytes = 2 * (IN_PACKED + OUT_PACKED) * 4        # double-buffered in+out
    fixed_bytes = (2 * IN_PACKED * OUT_PACKED * 4       # W_big (2 buffers)
                   + 2 * OUT_PACKED * 4                 # b_big
                   + (4 << 20))                         # compiler headroom
    vmem_tiles_cap = max(1, (vmem_budget - fixed_bytes) // row_bytes)

    if block_rows is None:
        want_tiles = 1024            # 32768 rows ~ 3.75 MB useful HBM / step
    else:
        want_tiles = max(1, int(block_rows) // PACK)
    want_tiles = min(want_tiles, vmem_tiles_cap)

    if want_tiles >= tiles:
        block_tiles = tiles          # single full block (== full dim is legal)
    else:
        block_tiles = max(8, (want_tiles // 8) * 8)     # f32 sublane multiple
        if block_tiles >= tiles:
            block_tiles = tiles

    # Give multi-TensorCore chips (v7x) at least two grid steps on the
    # "parallel" axis when there is enough work to split.
    if block_tiles == tiles and tiles >= 16:
        half = _round_up((tiles + 1) // 2, 8)
        if half < tiles:
            block_tiles = half

    grid = (pl.cdiv(tiles, block_tiles),)

    # ---- compiler params ---------------------------------------------------
    est_vmem = (2 * block_tiles * (IN_PACKED + OUT_PACKED) * 4
                + 2 * IN_PACKED * OUT_PACKED * 4 + 2 * OUT_PACKED * 4)
    compiler_kwargs = dict(dimension_semantics=("parallel",))
    if est_vmem > 12 * 1024 * 1024:  # would be tight under v5e's 16 MiB default
        compiler_kwargs["vmem_limit_bytes"] = int(
            min(est_vmem + (8 << 20), vmem_budget))

    cost = pl.CostEstimate(
        flops=2 * tiles * IN_PACKED * OUT_PACKED,
        transcendentals=0,
        bytes_accessed=(tiles * IN_PACKED * 4            # x read
                        + tiles * OUT_PACKED * 4         # out write
                        + IN_PACKED * OUT_PACKED * 4     # W_big
                        + OUT_PACKED * 4),               # b_big
    )

    out_packed = pl.pallas_call(
        _linear_packed_kernel,
        out_shape=jax.ShapeDtypeStruct((tiles, OUT_PACKED), jnp.float32),
        grid_spec=pltpu.PrefetchScalarGridSpec(
            num_scalar_prefetch=0,
            grid=grid,
            in_specs=[
                pl.BlockSpec((block_tiles, IN_PACKED), lambda i: (i, 0)),   # x
                pl.BlockSpec((IN_PACKED, OUT_PACKED), lambda i: (0, 0)),    # W_big (resident)
                pl.BlockSpec((1, OUT_PACKED), lambda i: (0, 0)),            # b_big (resident)
            ],
            out_specs=pl.BlockSpec((block_tiles, OUT_PACKED), lambda i: (i, 0)),
        ),
        compiler_params=pltpu.CompilerParams(**compiler_kwargs),
        cost_estimate=cost,
    )(x_p, w_big, b_big)

    out = out_packed.reshape(bp, OUT_FEATURES)  # contiguous -> zero-copy view
    if pad:
        out = out[:B]
    return out


def pack_params(w, b):
    """Build the lane-dense block-diagonal weight / tiled bias (built once)."""
    w = jnp.asarray(w, jnp.float32)                      # (20, 10) = (in, out)
    b = jnp.asarray(b, jnp.float32).reshape(-1)          # (10,)
    w_big = jnp.kron(jnp.eye(PACK, dtype=jnp.float32), w)        # (640, 320)
    b_big = jnp.tile(b, PACK).reshape(1, OUT_PACKED)              # (1, 320)
    return w_big, b_big


def init_params(key):
    """PyTorch-style uniform(+-1/sqrt(fan_in)) init; returns plain + packed params."""
    k_w, k_b = jax.random.split(key)
    bound = 1.0 / jnp.sqrt(float(IN_FEATURES))
    w = jax.random.uniform(k_w, (IN_FEATURES, OUT_FEATURES), jnp.float32, -bound, bound)
    b = jax.random.uniform(k_b, (OUT_FEATURES,), jnp.float32, -bound, bound)
    w_big, b_big = pack_params(w, b)     # hoisted out of the per-call path
    return {"w": w, "b": b, "w_big": w_big, "b_big": b_big}


def reference_forward(x, params):
    # FC_M13.forward applies only fc (the ReLU member is never used).
    return x @ params["w"] + params["b"]


if __name__ == "__main__":
    key = jax.random.PRNGKey(0)
    k_param, k_x1, k_x2 = jax.random.split(key, 3)

    params = init_params(k_param)
    w_big, b_big = params["w_big"], params["b_big"]

    # Small ragged batch: exercises the pad-to-32 path (single packed tile).
    x1 = jax.random.normal(k_x1, (13, IN_FEATURES), jnp.float32)
    out1 = jax.block_until_ready(fc_m13_forward(x1, w_big, b_big))
    assert out1.shape == (13, OUT_FEATURES)
    assert jnp.allclose(out1, reference_forward(x1, params), atol=1e-5, rtol=1e-5), \
        "mismatch vs reference (B=13)"

    # B multiple of 32 (zero-copy in/out); small explicit tile forces a
    # multi-step grid with a partial last block — the large-B code path.
    x2 = jax.random.normal(k_x2, (640, IN_FEATURES), jnp.float32)
    out2 = jax.block_until_ready(fc_m13_forward(x2, w_big, b_big, block_rows=256))
    assert out2.shape == (640, OUT_FEATURES)
    assert jnp.allclose(out2, reference_forward(x2, params), atol=1e-5, rtol=1e-5), \
        "mismatch vs reference (B=640, block_rows=256)"

    # Default tile-selection path (auto tile + >=2-step split).
    out3 = jax.block_until_ready(fc_m13_forward(x2, w_big, b_big))
    assert jnp.allclose(out3, reference_forward(x2, params), atol=1e-5, rtol=1e-5), \
        "mismatch vs reference (B=640, default tile)"

    print("KERNEL_OK")
</pallas_src>

<mosaic_0001>
module attributes {stable_mosaic.version = 11 : i64} {
  func.func @_linear_packed_kernel(%arg0: i32, %arg1: memref<1x640xf32, #tpu.memory_space<vmem>>, %arg2: memref<640x320xf32, #tpu.memory_space<vmem>>, %arg3: memref<1x320xf32, #tpu.memory_space<vmem>>, %arg4: memref<1x320xf32, #tpu.memory_space<vmem>>) attributes {dimension_semantics = [#tpu.dimension_semantics<parallel>], iteration_bounds = array<i64: 1>, scalar_prefetch = 0 : i64, scratch_operands = 0 : i64, tpu.core_type = #tpu.core_type<tc>, window_params = [{transform_indices = @transform_0, window_bounds = array<i64: 1, 640>}, {pipeline_mode = #tpu.pipeline_mode<synchronous>, transform_indices = @transform_1, window_bounds = array<i64: 640, 320>}, {pipeline_mode = #tpu.pipeline_mode<synchronous>, transform_indices = @transform_2, window_bounds = array<i64: 1, 320>}, {transform_indices = @transform_3, window_bounds = array<i64: 1, 320>}]} {
    %c0 = arith.constant 0 : index
    %c0_0 = arith.constant 0 : index
    %0 = vector.load %arg1[%c0, %c0_0] : memref<1x640xf32, #tpu.memory_space<vmem>>, vector<1x640xf32>
    %c0_1 = arith.constant 0 : index
    %c0_2 = arith.constant 0 : index
    %1 = vector.load %arg2[%c0_1, %c0_2] : memref<640x320xf32, #tpu.memory_space<vmem>>, vector<640x320xf32>
    %cst = arith.constant dense<0.000000e+00> : vector<1x320xf32>
    %2 = tpu.matmul %0, %1, %cst {dimension_numbers = #tpu.dot_dimension_numbers<[1], [0], [0], [1], [0, 0, 1, 1], [], []>} : vector<1x640xf32>, vector<640x320xf32>, vector<1x320xf32> -> vector<1x320xf32>
    %c0_3 = arith.constant 0 : index
    %c0_4 = arith.constant 0 : index
    %3 = vector.load %arg3[%c0_3, %c0_4] : memref<1x320xf32, #tpu.memory_space<vmem>>, vector<1x320xf32>
    %4 = arith.addf %2, %3 : vector<1x320xf32>
    %c0_5 = arith.constant 0 : index
    %c0_6 = arith.constant 0 : index
    %5 = vector.load %arg4[%c0_5, %c0_6] : memref<1x320xf32, #tpu.memory_space<vmem>>, vector<1x320xf32>
    tpu.vector_store %arg4[%c0_5, %c0_6], %4 {strides = array<i32>} : memref<1x320xf32, #tpu.memory_space<vmem>>, vector<1x320xf32>,
    return
  }
  func.func @transform_0(%arg0: i32) -> (i32, i32) {
    %c0_i32 = arith.constant 0 : i32
    %c0_i32_0 = arith.constant 0 : i32
    return %arg0, %c0_i32 : i32, i32
  }
  func.func @transform_1(%arg0: i32) -> (i32, i32) {
    %c0_i32 = arith.constant 0 : i32
    %c0_i32_0 = arith.constant 0 : i32
    %c0_i32_1 = arith.constant 0 : i32
    return %c0_i32, %c0_i32_0 : i32, i32
  }
  func.func @transform_2(%arg0: i32) -> (i32, i32) {
    %c0_i32 = arith.constant 0 : i32
    %c0_i32_0 = arith.constant 0 : i32
    %c0_i32_1 = arith.constant 0 : i32
    return %c0_i32, %c0_i32_0 : i32, i32
  }
  func.func @transform_3(%arg0: i32) -> (i32, i32) {
    %c0_i32 = arith.constant 0 : i32
    %c0_i32_0 = arith.constant 0 : i32
    return %arg0, %c0_i32 : i32, i32
  }
}

</mosaic_0001>

<llo_original>
// kernel: fc_m13_forward.1
$region0: #{fc_m13_forward.1}
  #allocation0 [shape = 'u32[]', space=smem, size = 0x4, offset = 0x4, fixed_abs, tag = 'smem constant byte address 0x4 - core index']
  #allocation1 [shape = 'u32[72,128]{1,0:T(1,128)}', space=vmem, size = 0x9000, scoped, tag = 'internal scratch']
  %s0 = inlined_call_operand.vmem [shape: f32[1,640], index: 0, kind: input, shape index: {}]
  %s1 = inlined_call_operand.vmem [shape: f32[640,320], index: 1, kind: input, shape index: {}]
  %s2 = inlined_call_operand.vmem [shape: f32[1,320], index: 2, kind: input, shape index: {}]
  %s3 = inlined_call_operand.vmem [shape: f32[1,320], index: 3, kind: output, shape index: {}]
  %s4 = sld [smem:[#allocation0]]
  $region22: #{fc_m13_forward.1} parent=0
    _
  %s6 = ssub.s32 1, %s4
  %s7 = scalar_select 0, %s6, %s4
  // Predicated region
  $region2: #{fc_m13_forward.1} parent=0 // pred_check
    _
  $region3: #{fc_m13_forward.1} parent=0 // pred_check_branch
    %9 = sbr.rel (0) target = $region5
  $region4: #{fc_m13_forward.1} parent=0 // pred_region
    _
  $region5: #{fc_m13_forward.1} parent=0 // pred_fallthru
    _
  // Predicated region
  $region6: #{fc_m13_forward.1} parent=0 // pred_check
    _
  $region7: #{fc_m13_forward.1} parent=0 // pred_check_branch
    %11 = sbr.rel (0) target = $region9
  $region8: #{fc_m13_forward.1} parent=0 // pred_region
    _
  $region9: #{fc_m13_forward.1} parent=0 // pred_fallthru
    _
  // Predicated region
  $region10: #{fc_m13_forward.1} parent=0 // pred_check
    _
  $region11: #{fc_m13_forward.1} parent=0 // pred_check_branch
    %13 = sbr.rel (0) target = $region13
  $region12: #{fc_m13_forward.1} parent=0 // pred_region
    _
  $region13: #{fc_m13_forward.1} parent=0 // pred_fallthru
    _
  %v14 = vld [vmem:[%s0] sm:$0x1f]
  %v15 = vld [vmem:[%s1] sm:$0xff]
  %v16 = vld [vmem:[%s1 + $0x8] sm:$0xff]
  %v17 = vld [vmem:[%s1 + $0x10] sm:$0xff]
  %v18 = vld [vmem:[%s1 + $0x18] sm:$0xff]
  %v19 = vld [vmem:[%s1 + $0x20] sm:$0xff]
  %v20 = vld [vmem:[%s1 + $0x28] sm:$0xff]
  %v21 = vld [vmem:[%s1 + $0x30] sm:$0xff]
  %v22 = vld [vmem:[%s1 + $0x38] sm:$0xff]
  %v23 = vld [vmem:[%s1 + $0x40] sm:$0xff]
  %v24 = vld [vmem:[%s1 + $0x48] sm:$0xff]
  %v25 = vld [vmem:[%s1 + $0x50] sm:$0xff]
  %v26 = vld [vmem:[%s1 + $0x58] sm:$0xff]
  %v27 = vld [vmem:[%s1 + $0x60] sm:$0xff]
  %v28 = vld [vmem:[%s1 + $0x68] sm:$0xff]
  %v29 = vld [vmem:[%s1 + $0x70] sm:$0xff]
  %v30 = vld [vmem:[%s1 + $0x78] sm:$0xff]
  %v31 = vld [vmem:[%s1 + $0x80] sm:$0xff]
  %v32 = vld [vmem:[%s1 + $0x88] sm:$0xff]
  %v33 = vld [vmem:[%s1 + $0x90] sm:$0xff]
  %v34 = vld [vmem:[%s1 + $0x98] sm:$0xff]
  %v35 = vld [vmem:[%s1 + $0xa0] sm:$0xff]
  %v36 = vld [vmem:[%s1 + $0xa8] sm:$0xff]
  %v37 = vld [vmem:[%s1 + $0xb0] sm:$0xff]
  %v38 = vld [vmem:[%s1 + $0xb8] sm:$0xff]
  %v39 = vld [vmem:[%s1 + $0xc0] sm:$0xff]
  %v40 = vld [vmem:[%s1 + $0xc8] sm:$0xff]
  %v41 = vld [vmem:[%s1 + $0xd0] sm:$0xff]
  %v42 = vld [vmem:[%s1 + $0xd8] sm:$0xff]
  %v43 = vld [vmem:[%s1 + $0xe0] sm:$0xff]
  %v44 = vld [vmem:[%s1 + $0xe8] sm:$0xff]
  %v45 = vld [vmem:[%s1 + $0xf0] sm:$0xff]
  %v46 = vld [vmem:[%s1 + $0xf8] sm:$0xff]
  %v47 = vld [vmem:[%s1 + $0x100] sm:$0xff]
  %v48 = vld [vmem:[%s1 + $0x108] sm:$0xff]
  %v49 = vld [vmem:[%s1 + $0x110] sm:$0xff]
  %v50 = vld [vmem:[%s1 + $0x118] sm:$0xff]
  %v51 = vld [vmem:[%s1 + $0x120] sm:$0xff]
  %v52 = vld [vmem:[%s1 + $0x128] sm:$0xff]
  %v53 = vld [vmem:[%s1 + $0x130] sm:$0xff]
  %v54 = vld [vmem:[%s1 + $0x138] sm:$0xff]
  %v55 = vld [vmem:[%s1 + $0x140] sm:$0xff]
  %v56 = vld [vmem:[%s1 + $0x148] sm:$0xff]
  %v57 = vld [vmem:[%s1 + $0x150] sm:$0xff]
  %v58 = vld [vmem:[%s1 + $0x158] sm:$0xff]
  %v59 = vld [vmem:[%s1 + $0x160] sm:$0xff]
  %v60 = vld [vmem:[%s1 + $0x168] sm:$0xff]
  %v61 = vld [vmem:[%s1 + $0x170] sm:$0xff]
  %v62 = vld [vmem:[%s1 + $0x178] sm:$0xff]
  %v63 = vld [vmem:[%s1 + $0x180] sm:$0xff]
  %v64 = vld [vmem:[%s1 + $0x188] sm:$0xff]
  %v65 = vld [vmem:[%s1 + $0x190] sm:$0xff]
  %v66 = vld [vmem:[%s1 + $0x198] sm:$0xff]
  %v67 = vld [vmem:[%s1 + $0x1a0] sm:$0xff]
  %v68 = vld [vmem:[%s1 + $0x1a8] sm:$0xff]
  %v69 = vld [vmem:[%s1 + $0x1b0] sm:$0xff]
  %v70 = vld [vmem:[%s1 + $0x1b8] sm:$0xff]
  %v71 = vld [vmem:[%s1 + $0x1c0] sm:$0xff]
  %v72 = vld [vmem:[%s1 + $0x1c8] sm:$0xff]
  %v73 = vld [vmem:[%s1 + $0x1d0] sm:$0xff]
  %v74 = vld [vmem:[%s1 + $0x1d8] sm:$0xff]
  %v75 = vld [vmem:[%s1 + $0x1e0] sm:$0xff]
  %v76 = vld [vmem:[%s1 + $0x1e8] sm:$0xff]
  %v77 = vld [vmem:[%s1 + $0x1f0] sm:$0xff]
  %v78 = vld [vmem:[%s1 + $0x1f8] sm:$0xff]
  %v79 = vld [vmem:[%s1 + $0x200] sm:$0xff]
  %v80 = vld [vmem:[%s1 + $0x208] sm:$0xff]
  %v81 = vld [vmem:[%s1 + $0x210] sm:$0xff]
  %v82 = vld [vmem:[%s1 + $0x218] sm:$0xff]
  %v83 = vld [vmem:[%s1 + $0x220] sm:$0xff]
  %v84 = vld [vmem:[%s1 + $0x228] sm:$0xff]
  %v85 = vld [vmem:[%s1 + $0x230] sm:$0xff]
  %v86 = vld [vmem:[%s1 + $0x238] sm:$0xff]
  %v87 = vld [vmem:[%s1 + $0x240] sm:$0xff]
  %v88 = vld [vmem:[%s1 + $0x248] sm:$0xff]
  %v89 = vld [vmem:[%s1 + $0x250] sm:$0xff]
  %v90 = vld [vmem:[%s1 + $0x258] sm:$0xff]
  %v91 = vld [vmem:[%s1 + $0x260] sm:$0xff]
  %v92 = vld [vmem:[%s1 + $0x268] sm:$0xff]
  %v93 = vld [vmem:[%s1 + $0x270] sm:$0xff]
  %v94 = vld [vmem:[%s1 + $0x278] sm:$0xff]
  %v95 = vld [vmem:[%s1 + $0x280] sm:$0xff]
  %v96 = vld [vmem:[%s1 + $0x288] sm:$0xff]
  %v97 = vld [vmem:[%s1 + $0x290] sm:$0xff]
  %v98 = vld [vmem:[%s1 + $0x298] sm:$0xff]
  %v99 = vld [vmem:[%s1 + $0x2a0] sm:$0xff]
  %v100 = vld [vmem:[%s1 + $0x2a8] sm:$0xff]
  %v101 = vld [vmem:[%s1 + $0x2b0] sm:$0xff]
  %v102 = vld [vmem:[%s1 + $0x2b8] sm:$0xff]
  %v103 = vld [vmem:[%s1 + $0x2c0] sm:$0xff]
  %v104 = vld [vmem:[%s1 + $0x2c8] sm:$0xff]
  %v105 = vld [vmem:[%s1 + $0x2d0] sm:$0xff]
  %v106 = vld [vmem:[%s1 + $0x2d8] sm:$0xff]
  %v107 = vld [vmem:[%s1 + $0x2e0] sm:$0xff]
  %v108 = vld [vmem:[%s1 + $0x2e8] sm:$0xff]
  %v109 = vld [vmem:[%s1 + $0x2f0] sm:$0xff]
  %v110 = vld [vmem:[%s1 + $0x2f8] sm:$0xff]
  %v111 = vld [vmem:[%s1 + $0x300] sm:$0xff]
  %v112 = vld [vmem:[%s1 + $0x308] sm:$0xff]
  %v113 = vld [vmem:[%s1 + $0x310] sm:$0xff]
  %v114 = vld [vmem:[%s1 + $0x318] sm:$0xff]
  %v115 = vld [vmem:[%s1 + $0x320] sm:$0xff]
  %v116 = vld [vmem:[%s1 + $0x328] sm:$0xff]
  %v117 = vld [vmem:[%s1 + $0x330] sm:$0xff]
  %v118 = vld [vmem:[%s1 + $0x338] sm:$0xff]
  %v119 = vld [vmem:[%s1 + $0x340] sm:$0xff]
  %v120 = vld [vmem:[%s1 + $0x348] sm:$0xff]
  %v121 = vld [vmem:[%s1 + $0x350] sm:$0xff]
  %v122 = vld [vmem:[%s1 + $0x358] sm:$0xff]
  %v123 = vld [vmem:[%s1 + $0x360] sm:$0xff]
  %v124 = vld [vmem:[%s1 + $0x368] sm:$0xff]
  %v125 = vld [vmem:[%s1 + $0x370] sm:$0xff]
  %v126 = vld [vmem:[%s1 + $0x378] sm:$0xff]
  %v127 = vld [vmem:[%s1 + $0x380] sm:$0xff]
  %v128 = vld [vmem:[%s1 + $0x388] sm:$0xff]
  %v129 = vld [vmem:[%s1 + $0x390] sm:$0xff]
  %v130 = vld [vmem:[%s1 + $0x398] sm:$0xff]
  %v131 = vld [vmem:[%s1 + $0x3a0] sm:$0xff]
  %v132 = vld [vmem:[%s1 + $0x3a8] sm:$0xff]
  %v133 = vld [vmem:[%s1 + $0x3b0] sm:$0xff]
  %v134 = vld [vmem:[%s1 + $0x3b8] sm:$0xff]
  %v135 = vld [vmem:[%s1 + $0x3c0] sm:$0xff]
  %v136 = vld [vmem:[%s1 + $0x3c8] sm:$0xff]
  %v137 = vld [vmem:[%s1 + $0x3d0] sm:$0xff]
  %v138 = vld [vmem:[%s1 + $0x3d8] sm:$0xff]
  %v139 = vld [vmem:[%s1 + $0x3e0] sm:$0xff]
  %v140 = vld [vmem:[%s1 + $0x3e8] sm:$0xff]
  %v141 = vld [vmem:[%s1 + $0x3f0] sm:$0xff]
  %v142 = vld [vmem:[%s1 + $0x3f8] sm:$0xff]
  %v143 = vld [vmem:[%s1 + $0x400] sm:$0xff]
  %v144 = vld [vmem:[%s1 + $0x408] sm:$0xff]
  %v145 = vld [vmem:[%s1 + $0x410] sm:$0xff]
  %v146 = vld [vmem:[%s1 + $0x418] sm:$0xff]
  %v147 = vld [vmem:[%s1 + $0x420] sm:$0xff]
  %v148 = vld [vmem:[%s1 + $0x428] sm:$0xff]
  %v149 = vld [vmem:[%s1 + $0x430] sm:$0xff]
  %v150 = vld [vmem:[%s1 + $0x438] sm:$0xff]
  %v151 = vld [vmem:[%s1 + $0x440] sm:$0xff]
  %v152 = vld [vmem:[%s1 + $0x448] sm:$0xff]
  %v153 = vld [vmem:[%s1 + $0x450] sm:$0xff]
  %v154 = vld [vmem:[%s1 + $0x458] sm:$0xff]
  %v155 = vld [vmem:[%s1 + $0x460] sm:$0xff]
  %v156 = vld [vmem:[%s1 + $0x468] sm:$0xff]
  %v157 = vld [vmem:[%s1 + $0x470] sm:$0xff]
  %v158 = vld [vmem:[%s1 + $0x478] sm:$0xff]
  %v159 = vld [vmem:[%s1 + $0x480] sm:$0xff]
  %v160 = vld [vmem:[%s1 + $0x488] sm:$0xff]
  %v161 = vld [vmem:[%s1 + $0x490] sm:$0xff]
  %v162 = vld [vmem:[%s1 + $0x498] sm:$0xff]
  %v163 = vld [vmem:[%s1 + $0x4a0] sm:$0xff]
  %v164 = vld [vmem:[%s1 + $0x4a8] sm:$0xff]
  %v165 = vld [vmem:[%s1 + $0x4b0] sm:$0xff]
  %v166 = vld [vmem:[%s1 + $0x4b8] sm:$0xff]
  %v167 = vld [vmem:[%s1 + $0x4c0] sm:$0xff]
  %v168 = vld [vmem:[%s1 + $0x4c8] sm:$0xff]
  %v169 = vld [vmem:[%s1 + $0x4d0] sm:$0xff]
  %v170 = vld [vmem:[%s1 + $0x4d8] sm:$0xff]
  %v171 = vld [vmem:[%s1 + $0x4e0] sm:$0xff]
  %v172 = vld [vmem:[%s1 + $0x4e8] sm:$0xff]
  %v173 = vld [vmem:[%s1 + $0x4f0] sm:$0xff]
  %v174 = vld [vmem:[%s1 + $0x4f8] sm:$0xff]
  %v175 = vld [vmem:[%s1 + $0x500] sm:$0xff]
  %v176 = vld [vmem:[%s1 + $0x508] sm:$0xff]
  %v177 = vld [vmem:[%s1 + $0x510] sm:$0xff]
  %v178 = vld [vmem:[%s1 + $0x518] sm:$0xff]
  %v179 = vld [vmem:[%s1 + $0x520] sm:$0xff]
  %v180 = vld [vmem:[%s1 + $0x528] sm:$0xff]
  %v181 = vld [vmem:[%s1 + $0x530] sm:$0xff]
  %v182 = vld [vmem:[%s1 + $0x538] sm:$0xff]
  %v183 = vld [vmem:[%s1 + $0x540] sm:$0xff]
  %v184 = vld [vmem:[%s1 + $0x548] sm:$0xff]
  %v185 = vld [vmem:[%s1 + $0x550] sm:$0xff]
  %v186 = vld [vmem:[%s1 + $0x558] sm:$0xff]
  %v187 = vld [vmem:[%s1 + $0x560] sm:$0xff]
  %v188 = vld [vmem:[%s1 + $0x568] sm:$0xff]
  %v189 = vld [vmem:[%s1 + $0x570] sm:$0xff]
  %v190 = vld [vmem:[%s1 + $0x578] sm:$0xff]
  %v191 = vld [vmem:[%s1 + $0x580] sm:$0xff]
  %v192 = vld [vmem:[%s1 + $0x588] sm:$0xff]
  %v193 = vld [vmem:[%s1 + $0x590] sm:$0xff]
  %v194 = vld [vmem:[%s1 + $0x598] sm:$0xff]
  %v195 = vld [vmem:[%s1 + $0x5a0] sm:$0xff]
  %v196 = vld [vmem:[%s1 + $0x5a8] sm:$0xff]
  %v197 = vld [vmem:[%s1 + $0x5b0] sm:$0xff]
  %v198 = vld [vmem:[%s1 + $0x5b8] sm:$0xff]
  %v199 = vld [vmem:[%s1 + $0x5c0] sm:$0xff]
  %v200 = vld [vmem:[%s1 + $0x5c8] sm:$0xff]
  %v201 = vld [vmem:[%s1 + $0x5d0] sm:$0xff]
  %v202 = vld [vmem:[%s1 + $0x5d8] sm:$0xff]
  %v203 = vld [vmem:[%s1 + $0x5e0] sm:$0xff]
  %v204 = vld [vmem:[%s1 + $0x5e8] sm:$0xff]
  %v205 = vld [vmem:[%s1 + $0x5f0] sm:$0xff]
  %v206 = vld [vmem:[%s1 + $0x5f8] sm:$0xff]
  %v207 = vld [vmem:[%s1 + $0x600] sm:$0xff]
  %v208 = vld [vmem:[%s1 + $0x608] sm:$0xff]
  %v209 = vld [vmem:[%s1 + $0x610] sm:$0xff]
  %v210 = vld [vmem:[%s1 + $0x618] sm:$0xff]
  %v211 = vld [vmem:[%s1 + $0x620] sm:$0xff]
  %v212 = vld [vmem:[%s1 + $0x628] sm:$0xff]
  %v213 = vld [vmem:[%s1 + $0x630] sm:$0xff]
  %v214 = vld [vmem:[%s1 + $0x638] sm:$0xff]
  %v215 = vld [vmem:[%s1 + $0x640] sm:$0xff]
  %v216 = vld [vmem:[%s1 + $0x648] sm:$0xff]
  %v217 = vld [vmem:[%s1 + $0x650] sm:$0xff]
  %v218 = vld [vmem:[%s1 + $0x658] sm:$0xff]
  %v219 = vld [vmem:[%s1 + $0x660] sm:$0xff]
  %v220 = vld [vmem:[%s1 + $0x668] sm:$0xff]
  %v221 = vld [vmem:[%s1 + $0x670] sm:$0xff]
  %v222 = vld [vmem:[%s1 + $0x678] sm:$0xff]
  %v223 = vld [vmem:[%s1 + $0x680] sm:$0xff]
  %v224 = vld [vmem:[%s1 + $0x688] sm:$0xff]
  %v225 = vld [vmem:[%s1 + $0x690] sm:$0xff]
  %v226 = vld [vmem:[%s1 + $0x698] sm:$0xff]
  %v227 = vld [vmem:[%s1 + $0x6a0] sm:$0xff]
  %v228 = vld [vmem:[%s1 + $0x6a8] sm:$0xff]
  %v229 = vld [vmem:[%s1 + $0x6b0] sm:$0xff]
  %v230 = vld [vmem:[%s1 + $0x6b8] sm:$0xff]
  %v231 = vld [vmem:[%s1 + $0x6c0] sm:$0xff]
  %v232 = vld [vmem:[%s1 + $0x6c8] sm:$0xff]
  %v233 = vld [vmem:[%s1 + $0x6d0] sm:$0xff]
  %v234 = vld [vmem:[%s1 + $0x6d8] sm:$0xff]
  %v235 = vld [vmem:[%s1 + $0x6e0] sm:$0xff]
  %v236 = vld [vmem:[%s1 + $0x6e8] sm:$0xff]
  %v237 = vld [vmem:[%s1 + $0x6f0] sm:$0xff]
  %v238 = vld [vmem:[%s1 + $0x6f8] sm:$0xff]
  %v239 = vld [vmem:[%s1 + $0x700] sm:$0xff]
  %v240 = vld [vmem:[%s1 + $0x708] sm:$0xff]
  %v241 = vld [vmem:[%s1 + $0x710] sm:$0xff]
  %v242 = vld [vmem:[%s1 + $0x718] sm:$0xff]
  %v243 = vld [vmem:[%s1 + $0x720] sm:$0xff]
  %v244 = vld [vmem:[%s1 + $0x728] sm:$0xff]
  %v245 = vld [vmem:[%s1 + $0x730] sm:$0xff]
  %v246 = vld [vmem:[%s1 + $0x738] sm:$0xff]
  %v247 = vld [vmem:[%s1 + $0x740] sm:$0xff]
  %v248 = vld [vmem:[%s1 + $0x748] sm:$0xff]
  %v249 = vld [vmem:[%s1 + $0x750] sm:$0xff]
  %v250 = vld [vmem:[%s1 + $0x758] sm:$0xff]
  %v251 = vld [vmem:[%s1 + $0x760] sm:$0xff]
  %v252 = vld [vmem:[%s1 + $0x768] sm:$0xff]
  %v253 = vld [vmem:[%s1 + $0x770] sm:$0xff]
  %v254 = vld [vmem:[%s1 + $0x778] sm:$0xff]
  %v255 = vld [vmem:[%s2] sm:$0x7]
  %v257 = vperm.slane %v14, 0
  %v258 = vperm.slane %v14, 1
  %v259 = vperm.slane %v14, 2
  %v260 = vperm.slane %v14, 3
  %v261 = vperm.slane %v14, 4
  %v268 = vperm.slane %v255, 0
  %v269 = vperm.slane %v255, 1
  %v270 = vperm.slane %v255, 2
  %274 = vmatpush.msra.mxu0 %v60
  %275 = vmatpush.msra.mxu0 %v57
  %276 = vmatpush.msra.mxu0 %v54
  %277 = vmatpush.msra.mxu0 %v51
  %278 = vmatpush.msra.mxu0 %v48
  %279 = vmatpush.msra.mxu0 %v45
  %280 = vmatpush.msra.mxu0 %v42
  %281 = vmatpush.msra.mxu0 %v39
  %282 = vmatpush.msra.mxu0 %v36
  %283 = vmatpush.msra.mxu0 %v33
  %284 = vmatpush.msra.mxu0 %v30
  %285 = vmatpush.msra.mxu0 %v27
  %286 = vmatpush.msra.mxu0 %v24
  %287 = vmatpush.msra.mxu0 %v21
  %288 = vmatpush.msra.mxu0 %v18
  %289 = vmatpush.msra.mxu0 %v15
  %290 = vmatmul.f32.gmra.mxu0 %v257
  %v291 = vpop.f32.mrf.mxu0
  %v292 = vadd.f32 %v268, %v291
  %293 = vdwg.mxu0
  %294 = vmatpush.msra.mxu0 %v108
  %295 = vmatpush.msra.mxu0 %v105
  %296 = vmatpush.msra.mxu0 %v102
  %297 = vmatpush.msra.mxu0 %v99
  %298 = vmatpush.msra.mxu0 %v96
  %299 = vmatpush.msra.mxu0 %v93
  %300 = vmatpush.msra.mxu0 %v90
  %301 = vmatpush.msra.mxu0 %v87
  %302 = vmatpush.msra.mxu0 %v84
  %303 = vmatpush.msra.mxu0 %v81
  %304 = vmatpush.msra.mxu0 %v78
  %305 = vmatpush.msra.mxu0 %v75
  %306 = vmatpush.msra.mxu0 %v72
  %307 = vmatpush.msra.mxu0 %v69
  %308 = vmatpush.msra.mxu0 %v66
  %309 = vmatpush.msra.mxu0 %v63
  %310 = vmatmul.f32.gmra.mxu0 %v258
  %v311 = vpop.f32.mrf.mxu0
  %v312 = vadd.f32 %v292, %v311
  %313 = vdwg.mxu0
  %314 = vmatpush.msra.mxu0 %v156
  %315 = vmatpush.msra.mxu0 %v153
  %316 = vmatpush.msra.mxu0 %v150
  %317 = vmatpush.msra.mxu0 %v147
  %318 = vmatpush.msra.mxu0 %v144
  %319 = vmatpush.msra.mxu0 %v141
  %320 = vmatpush.msra.mxu0 %v138
  %321 = vmatpush.msra.mxu0 %v135
  %322 = vmatpush.msra.mxu0 %v132
  %323 = vmatpush.msra.mxu0 %v129
  %324 = vmatpush.msra.mxu0 %v126
  %325 = vmatpush.msra.mxu0 %v123
  %326 = vmatpush.msra.mxu0 %v120
  %327 = vmatpush.msra.mxu0 %v117
  %328 = vmatpush.msra.mxu0 %v114
  %329 = vmatpush.msra.mxu0 %v111
  %330 = vmatmul.f32.gmra.mxu0 %v259
  %v331 = vpop.f32.mrf.mxu0
  %v332 = vadd.f32 %v312, %v331
  %333 = vdwg.mxu0
  %334 = vmatpush.msra.mxu0 %v204
  %335 = vmatpush.msra.mxu0 %v201
  %336 = vmatpush.msra.mxu0 %v198
  %337 = vmatpush.msra.mxu0 %v195
  %338 = vmatpush.msra.mxu0 %v192
  %339 = vmatpush.msra.mxu0 %v189
  %340 = vmatpush.msra.mxu0 %v186
  %341 = vmatpush.msra.mxu0 %v183
  %342 = vmatpush.msra.mxu0 %v180
  %343 = vmatpush.msra.mxu0 %v177
  %344 = vmatpush.msra.mxu0 %v174
  %345 = vmatpush.msra.mxu0 %v171
  %346 = vmatpush.msra.mxu0 %v168
  %347 = vmatpush.msra.mxu0 %v165
  %348 = vmatpush.msra.mxu0 %v162
  %349 = vmatpush.msra.mxu0 %v159
  %350 = vmatmul.f32.gmra.mxu0 %v260
  %v351 = vpop.f32.mrf.mxu0
  %v352 = vadd.f32 %v332, %v351
  %353 = vdwg.mxu0
  %354 = vmatpush.msra.mxu0 %v252
  %355 = vmatpush.msra.mxu0 %v249
  %356 = vmatpush.msra.mxu0 %v246
  %357 = vmatpush.msra.mxu0 %v243
  %358 = vmatpush.msra.mxu0 %v240
  %359 = vmatpush.msra.mxu0 %v237
  %360 = vmatpush.msra.mxu0 %v234
  %361 = vmatpush.msra.mxu0 %v231
  %362 = vmatpush.msra.mxu0 %v228
  %363 = vmatpush.msra.mxu0 %v225
  %364 = vmatpush.msra.mxu0 %v222
  %365 = vmatpush.msra.mxu0 %v219
  %366 = vmatpush.msra.mxu0 %v216
  %367 = vmatpush.msra.mxu0 %v213
  %368 = vmatpush.msra.mxu0 %v210
  %369 = vmatpush.msra.mxu0 %v207
  %370 = vmatmul.f32.gmra.mxu0 %v261
  %v371 = vpop.f32.mrf.mxu0
  %v372 = vadd.f32 %v352, %v371
  %373 = vdwg.mxu0
  %374 = vmatpush.msra.mxu0 %v61
  %375 = vmatpush.msra.mxu0 %v58
  %376 = vmatpush.msra.mxu0 %v55
  %377 = vmatpush.msra.mxu0 %v52
  %378 = vmatpush.msra.mxu0 %v49
  %379 = vmatpush.msra.mxu0 %v46
  %380 = vmatpush.msra.mxu0 %v43
  %381 = vmatpush.msra.mxu0 %v40
  %382 = vmatpush.msra.mxu0 %v37
  %383 = vmatpush.msra.mxu0 %v34
  %384 = vmatpush.msra.mxu0 %v31
  %385 = vmatpush.msra.mxu0 %v28
  %386 = vmatpush.msra.mxu0 %v25
  %387 = vmatpush.msra.mxu0 %v22
  %388 = vmatpush.msra.mxu0 %v19
  %389 = vmatpush.msra.mxu0 %v16
  %390 = vmatmul.f32.gmra.mxu0 %v257
  %v391 = vpop.f32.mrf.mxu0
  %v392 = vadd.f32 %v269, %v391
  %393 = vdwg.mxu0
  %394 = vmatpush.msra.mxu0 %v109
  %395 = vmatpush.msra.mxu0 %v106
  %396 = vmatpush.msra.mxu0 %v103
  %397 = vmatpush.msra.mxu0 %v100
  %398 = vmatpush.msra.mxu0 %v97
  %399 = vmatpush.msra.mxu0 %v94
  %400 = vmatpush.msra.mxu0 %v91
  %401 = vmatpush.msra.mxu0 %v88
  %402 = vmatpush.msra.mxu0 %v85
  %403 = vmatpush.msra.mxu0 %v82
  %404 = vmatpush.msra.mxu0 %v79
  %405 = vmatpush.msra.mxu0 %v76
  %406 = vmatpush.msra.mxu0 %v73
  %407 = vmatpush.msra.mxu0 %v70
  %408 = vmatpush.msra.mxu0 %v67
  %409 = vmatpush.msra.mxu0 %v64
  %410 = vmatmul.f32.gmra.mxu0 %v258
  %v411 = vpop.f32.mrf.mxu0
  %v412 = vadd.f32 %v392, %v411
  %413 = vdwg.mxu0
  %414 = vmatpush.msra.mxu0 %v157
  %415 = vmatpush.msra.mxu0 %v154
  %416 = vmatpush.msra.mxu0 %v151
  %417 = vmatpush.msra.mxu0 %v148
  %418 = vmatpush.msra.mxu0 %v145
  %419 = vmatpush.msra.mxu0 %v142
  %420 = vmatpush.msra.mxu0 %v139
  %421 = vmatpush.msra.mxu0 %v136
  %422 = vmatpush.msra.mxu0 %v133
  %423 = vmatpush.msra.mxu0 %v130
  %424 = vmatpush.msra.mxu0 %v127
  %425 = vmatpush.msra.mxu0 %v124
  %426 = vmatpush.msra.mxu0 %v121
  %427 = vmatpush.msra.mxu0 %v118
  %428 = vmatpush.msra.mxu0 %v115
  %429 = vmatpush.msra.mxu0 %v112
  %430 = vmatmul.f32.gmra.mxu0 %v259
  %v431 = vpop.f32.mrf.mxu0
  %v432 = vadd.f32 %v412, %v431
  %433 = vdwg.mxu0
  %434 = vmatpush.msra.mxu0 %v205
  %435 = vmatpush.msra.mxu0 %v202
  %436 = vmatpush.msra.mxu0 %v199
  %437 = vmatpush.msra.mxu0 %v196
  %438 = vmatpush.msra.mxu0 %v193
  %439 = vmatpush.msra.mxu0 %v190
  %440 = vmatpush.msra.mxu0 %v187
  %441 = vmatpush.msra.mxu0 %v184
  %442 = vmatpush.msra.mxu0 %v181
  %443 = vmatpush.msra.mxu0 %v178
  %444 = vmatpush.msra.mxu0 %v175
  %445 = vmatpush.msra.mxu0 %v172
  %446 = vmatpush.msra.mxu0 %v169
  %447 = vmatpush.msra.mxu0 %v166
  %448 = vmatpush.msra.mxu0 %v163
  %449 = vmatpush.msra.mxu0 %v160
  %450 = vmatmul.f32.gmra.mxu0 %v260
  %v451 = vpop.f32.mrf.mxu0
  %v452 = vadd.f32 %v432, %v451
  %453 = vdwg.mxu0
  %454 = vmatpush.msra.mxu0 %v253
  %455 = vmatpush.msra.mxu0 %v250
  %456 = vmatpush.msra.mxu0 %v247
  %457 = vmatpush.msra.mxu0 %v244
  %458 = vmatpush.msra.mxu0 %v241
  %459 = vmatpush.msra.mxu0 %v238
  %460 = vmatpush.msra.mxu0 %v235
  %461 = vmatpush.msra.mxu0 %v232
  %462 = vmatpush.msra.mxu0 %v229
  %463 = vmatpush.msra.mxu0 %v226
  %464 = vmatpush.msra.mxu0 %v223
  %465 = vmatpush.msra.mxu0 %v220
  %466 = vmatpush.msra.mxu0 %v217
  %467 = vmatpush.msra.mxu0 %v214
  %468 = vmatpush.msra.mxu0 %v211
  %469 = vmatpush.msra.mxu0 %v208
  %470 = vmatmul.f32.gmra.mxu0 %v261
  %v471 = vpop.f32.mrf.mxu0
  %v472 = vadd.f32 %v452, %v471
  %473 = vdwg.mxu0
  %474 = vmatpush.msra.mxu0 %v62
  %475 = vmatpush.msra.mxu0 %v59
  %476 = vmatpush.msra.mxu0 %v56
  %477 = vmatpush.msra.mxu0 %v53
  %478 = vmatpush.msra.mxu0 %v50
  %479 = vmatpush.msra.mxu0 %v47
  %480 = vmatpush.msra.mxu0 %v44
  %481 = vmatpush.msra.mxu0 %v41
  %482 = vmatpush.msra.mxu0 %v38
  %483 = vmatpush.msra.mxu0 %v35
  %484 = vmatpush.msra.mxu0 %v32
  %485 = vmatpush.msra.mxu0 %v29
  %486 = vmatpush.msra.mxu0 %v26
  %487 = vmatpush.msra.mxu0 %v23
  %488 = vmatpush.msra.mxu0 %v20
  %489 = vmatpush.msra.mxu0 %v17
  %490 = vmatmul.f32.gmra.mxu0 %v257
  %v491 = vpop.f32.mrf.mxu0
  %v492 = vadd.f32 %v270, %v491
  %493 = vdwg.mxu0
  %494 = vmatpush.msra.mxu0 %v110
  %495 = vmatpush.msra.mxu0 %v107
  %496 = vmatpush.msra.mxu0 %v104
  %497 = vmatpush.msra.mxu0 %v101
  %498 = vmatpush.msra.mxu0 %v98
  %499 = vmatpush.msra.mxu0 %v95
  %500 = vmatpush.msra.mxu0 %v92
  %501 = vmatpush.msra.mxu0 %v89
  %502 = vmatpush.msra.mxu0 %v86
  %503 = vmatpush.msra.mxu0 %v83
  %504 = vmatpush.msra.mxu0 %v80
  %505 = vmatpush.msra.mxu0 %v77
  %506 = vmatpush.msra.mxu0 %v74
  %507 = vmatpush.msra.mxu0 %v71
  %508 = vmatpush.msra.mxu0 %v68
  %509 = vmatpush.msra.mxu0 %v65
  %510 = vmatmul.f32.gmra.mxu0 %v258
  %v511 = vpop.f32.mrf.mxu0
  %v512 = vadd.f32 %v492, %v511
  %513 = vdwg.mxu0
  %514 = vmatpush.msra.mxu0 %v158
  %515 = vmatpush.msra.mxu0 %v155
  %516 = vmatpush.msra.mxu0 %v152
  %517 = vmatpush.msra.mxu0 %v149
  %518 = vmatpush.msra.mxu0 %v146
  %519 = vmatpush.msra.mxu0 %v143
  %520 = vmatpush.msra.mxu0 %v140
  %521 = vmatpush.msra.mxu0 %v137
  %522 = vmatpush.msra.mxu0 %v134
  %523 = vmatpush.msra.mxu0 %v131
  %524 = vmatpush.msra.mxu0 %v128
  %525 = vmatpush.msra.mxu0 %v125
  %526 = vmatpush.msra.mxu0 %v122
  %527 = vmatpush.msra.mxu0 %v119
  %528 = vmatpush.msra.mxu0 %v116
  %529 = vmatpush.msra.mxu0 %v113
  %530 = vmatmul.f32.gmra.mxu0 %v259
  %v531 = vpop.f32.mrf.mxu0
  %v532 = vadd.f32 %v512, %v531
  %533 = vdwg.mxu0
  %534 = vmatpush.msra.mxu0 %v206
  %535 = vmatpush.msra.mxu0 %v203
  %536 = vmatpush.msra.mxu0 %v200
  %537 = vmatpush.msra.mxu0 %v197
  %538 = vmatpush.msra.mxu0 %v194
  %539 = vmatpush.msra.mxu0 %v191
  %540 = vmatpush.msra.mxu0 %v188
  %541 = vmatpush.msra.mxu0 %v185
  %542 = vmatpush.msra.mxu0 %v182
  %543 = vmatpush.msra.mxu0 %v179
  %544 = vmatpush.msra.mxu0 %v176
  %545 = vmatpush.msra.mxu0 %v173
  %546 = vmatpush.msra.mxu0 %v170
  %547 = vmatpush.msra.mxu0 %v167
  %548 = vmatpush.msra.mxu0 %v164
  %549 = vmatpush.msra.mxu0 %v161
  %550 = vmatmul.f32.gmra.mxu0 %v260
  %v551 = vpop.f32.mrf.mxu0
  %v552 = vadd.f32 %v532, %v551
  %553 = vdwg.mxu0
  %554 = vmatpush.msra.mxu0 %v254
  %555 = vmatpush.msra.mxu0 %v251
  %556 = vmatpush.msra.mxu0 %v248
  %557 = vmatpush.msra.mxu0 %v245
  %558 = vmatpush.msra.mxu0 %v242
  %559 = vmatpush.msra.mxu0 %v239
  %560 = vmatpush.msra.mxu0 %v236
  %561 = vmatpush.msra.mxu0 %v233
  %562 = vmatpush.msra.mxu0 %v230
  %563 = vmatpush.msra.mxu0 %v227
  %564 = vmatpush.msra.mxu0 %v224
  %565 = vmatpush.msra.mxu0 %v221
  %566 = vmatpush.msra.mxu0 %v218
  %567 = vmatpush.msra.mxu0 %v215
  %568 = vmatpush.msra.mxu0 %v212
  %569 = vmatpush.msra.mxu0 %v209
  %570 = vmatmul.f32.gmra.mxu0 %v261
  %v571 = vpop.f32.mrf.mxu0
  %v572 = vadd.f32 %v552, %v571
  %573 = vdwg.mxu0
  %v577 = vrot.slane %v472, 7
  %v578 = vrot.slane %v572, 6
  %vm579 = vcmask 1040384
  %v580 = vsel %vm579, %v372, %v577
  %vm581 = vcmask 1041408
  %v582 = vsel %vm581, %v580, %v578
  %v584 = vlaneseq
  %vm585 = vcmp.ge.s32.totalorder %v584, 0
  %vm586 = vcmp.lt.s32.totalorder %v584, 320
  %vm587 = vmand %vm585, %vm586
  %588 = vst.msk [vmem:[%s3] sm:$0x7] %vm587, %v582
  // Predicated region
  $region14: #{fc_m13_forward.1} parent=0 // pred_check
    _
  $region15: #{fc_m13_forward.1} parent=0 // pred_check_branch
    %590 = sbr.rel (0) target = $region17
  $region16: #{fc_m13_forward.1} parent=0 // pred_region
    _
  $region17: #{fc_m13_forward.1} parent=0 // pred_fallthru
    _
  // Predicated region
  $region18: #{fc_m13_forward.1} parent=0 // pred_check
    _
  $region19: #{fc_m13_forward.1} parent=0 // pred_check_branch
    %592 = sbr.rel (0) target = $region21
  $region20: #{fc_m13_forward.1} parent=0 // pred_region
    _
  $region21: #{fc_m13_forward.1} parent=0 // pred_fallthru
    _

</llo_original>
